<compile_context>
chip_gen: v6e
topology: v6e:2x2x1
jax: 0.10.0
libtpu: 0.0.40
codegen_flags: <defaults>
</compile_context>

<pallas_src>
from typing import NamedTuple, Optional

import jax
import jax.numpy as jnp
from jax.experimental import pallas as pl
from jax.experimental.pallas import tpu as pltpu


def _round_up(x: int, m: int) -> int:
    return (x + m - 1) // m * m


class QNetParams(NamedTuple):
    """Padded / pre-cast parameters. Build once with prepare_qnet_params."""
    w1: jax.Array   # (in_dim, hid_p)   MXU feed dtype
    b1: jax.Array   # (1, hid_p)        f32
    w2: jax.Array   # (hid_p, out_p)    MXU feed dtype
    b2: jax.Array   # (1, out_p)        f32
    out_dim: int    # true (unpadded) output width -- static python int


def prepare_qnet_params(w1, b1, w2, b2, *, mxu_dtype=None) -> QNetParams:
    """One-time parameter prep (hoisted out of the per-call forward path).

    Pads hidden/output dims to multiples of 128 (semantics-preserving:
    relu(0) = 0 and zero W2 rows contribute nothing) and optionally casts the
    weights to an MXU feed dtype (e.g. bf16). Biases stay f32 for the f32
    epilogue. Weights are (in, out), i.e. pre-transposed vs PyTorch (out, in).
    """
    in_dim, hid = w1.shape
    hid2, out_dim = w2.shape
    assert hid2 == hid and b1.shape == (hid,) and b2.shape == (out_dim,)
    hid_p = _round_up(hid, 128)
    out_p = _round_up(out_dim, 128)
    w_dtype = mxu_dtype if mxu_dtype is not None else w1.dtype
    w1_p = jnp.pad(w1.astype(w_dtype), ((0, 0), (0, hid_p - hid)))
    b1_p = jnp.pad(b1.astype(jnp.float32), (0, hid_p - hid)).reshape(1, hid_p)
    w2_p = jnp.pad(w2.astype(w_dtype), ((0, hid_p - hid), (0, out_p - out_dim)))
    b2_p = jnp.pad(b2.astype(jnp.float32), (0, out_p - out_dim)).reshape(1, out_p)
    return QNetParams(w1_p, b1_p, w2_p, b2_p, int(out_dim))


def qnet_kernel(x_ref, w1_ref, b1_ref, w2_ref, b2_ref, o_ref):
    """One batch tile: o = relu(x @ W1 + b1) @ W2 + b2, f32 accumulation."""
    # First layer on the MXU; cast only the matmul operand to the feed dtype
    # (no-op when weights are f32, bf16 MXU feed otherwise).
    x = x_ref[...].astype(w1_ref.dtype)
    h = jnp.dot(x, w1_ref[...], preferred_element_type=jnp.float32)
    # Bias + ReLU epilogue stays f32 on the VPU (v5e has no bf16 VPU).
    h = jnp.maximum(h + b1_ref[...], 0.0)
    # Second layer on the MXU; weights are 128-padded so compute is lane-dense.
    o = jnp.dot(h.astype(w2_ref.dtype), w2_ref[...],
                preferred_element_type=jnp.float32)
    o = o + b2_ref[...]
    # Store only the true out_dim columns -> narrow HBM writeback.
    o_ref[...] = o[:, :o_ref.shape[-1]].astype(o_ref.dtype)


def _vmem_capacity_bytes() -> int:
    try:
        return int(pltpu.get_tpu_info().vmem_capacity_bytes)
    except Exception:
        return 64 << 20   # conservative fallback (v7x per-TensorCore VMEM)


def _forward_call(x, p: QNetParams, tb: int, n_tiles: int, vmem_limit: int,
                  cost: pl.CostEstimate, single_buffer_weights: bool):
    B, in_dim = x.shape
    hid_p = p.w1.shape[1]
    out_p = p.w2.shape[1]

    if single_buffer_weights:
        # Constant index_map => fetched once and resident; one buffer suffices
        # (halves the resident-weight VMEM footprint vs default pipelining).
        def resident(shape):
            return pl.BlockSpec(shape, lambda i: (0, 0),
                                pipeline_mode=pl.Buffered(1))
    else:
        def resident(shape):
            return pl.BlockSpec(shape, lambda i: (0, 0))

    return pl.pallas_call(
        qnet_kernel,
        out_shape=jax.ShapeDtypeStruct((B, p.out_dim), x.dtype),
        grid=(n_tiles,),
        in_specs=[
            # Streaming activation tile (ragged last tile handled by Pallas).
            pl.BlockSpec((tb, in_dim), lambda i: (i, 0)),
            # Weights / biases: constant index_map -> resident across the grid.
            resident((in_dim, hid_p)),
            resident((1, hid_p)),
            resident((hid_p, out_p)),
            resident((1, out_p)),
        ],
        out_specs=pl.BlockSpec((tb, p.out_dim), lambda i: (i, 0)),
        compiler_params=pltpu.CompilerParams(
            # Batch tiles are independent -> shard across v7x's 2 TensorCores;
            # harmless on single-TC v5e/v6e.
            dimension_semantics=("parallel",),
            vmem_limit_bytes=vmem_limit,
        ),
        cost_estimate=cost,
    )(x, p.w1, p.b1, p.w2, p.b2)


def qnet_forward(x, params: QNetParams, *, block_b: Optional[int] = None):
    """QNet forward: relu(x @ W1 + b1) @ W2 + b2 for x of shape (B, in_dim)."""
    B, in_dim = x.shape
    assert in_dim == params.w1.shape[0], "input feature dim mismatch"
    hid_p = params.w1.shape[1]
    out_p = params.w2.shape[1]
    out_dim = params.out_dim

    x_item = jnp.dtype(x.dtype).itemsize
    w_item = jnp.dtype(params.w1.dtype).itemsize
    o_item = x_item

    # ---- generation-aware VMEM budget and batch-tile selection -------------
    vmem_cap = _vmem_capacity_bytes()
    budget = int(vmem_cap * 0.7)  # headroom for compiler scratch / pipelining

    # Resident weights/biases (worst case: double-buffered if Buffered(1) is
    # unavailable on this JAX version).
    resident_bytes = 2 * ((params.w1.size + params.w2.size) * w_item
                          + (params.b1.size + params.b2.size) * 4)
    # Per-batch-row VMEM: double-buffered x and o tiles, the f32 hidden temp,
    # its MXU-dtype copy, the in-kernel x cast, and the padded f32 output
    # before the narrowing slice.
    per_row = (2 * in_dim * x_item + 2 * out_dim * o_item
               + in_dim * w_item + hid_p * (4 + w_item) + out_p * 4)

    # MXU M dim (256 on v6e/v7x, a multiple of v5e's 128); 8 sublanes for tiny B.
    base = 256 if B >= 256 else 8
    tb = 2048 if block_b is None else int(block_b)          # large default tile
    tb = max(base, _round_up(min(tb, _round_up(B, base)), base))
    tb_vmem = max(base, ((budget - resident_bytes) // max(per_row, 1))
                  // base * base)
    tb = min(tb, tb_vmem)
    if B > 2 * base:   # keep >= 2 grid steps so both v7x TensorCores get work
        tb = min(tb, _round_up(-(-B // 2), base))
    n_tiles = pl.cdiv(B, tb)

    needed = resident_bytes + tb * per_row + (2 << 20)
    vmem_limit = int(min(max(needed * 3 // 2, 32 << 20), vmem_cap * 4 // 5))

    cost = pl.CostEstimate(
        flops=2 * B * (in_dim * hid_p + hid_p * out_p),
        transcendentals=0,
        bytes_accessed=(x.size * x_item + B * out_dim * o_item
                        + (params.w1.size + params.w2.size) * w_item
                        + (params.b1.size + params.b2.size) * 4),
    )

    try:
        return _forward_call(x, params, tb, n_tiles, vmem_limit, cost,
                             single_buffer_weights=True)
    except Exception:
        # Fallback for JAX versions without BlockSpec(pipeline_mode=...).
        return _forward_call(x, params, tb, n_tiles, vmem_limit, cost,
                             single_buffer_weights=False)


def init_qnet_params(key, input_size, hidden_size, output_size):
    """Mimics torch.nn.Linear default init: U(-1/sqrt(fan_in), 1/sqrt(fan_in)).
    Weights are stored as (in, out), i.e. pre-transposed vs PyTorch's (out, in)."""
    k1, k2, k3, k4 = jax.random.split(key, 4)
    bound1 = 1.0 / jnp.sqrt(jnp.asarray(input_size, jnp.float32))
    bound2 = 1.0 / jnp.sqrt(jnp.asarray(hidden_size, jnp.float32))
    w1 = jax.random.uniform(k1, (input_size, hidden_size), jnp.float32,
                            -bound1, bound1)
    b1 = jax.random.uniform(k2, (hidden_size,), jnp.float32, -bound1, bound1)
    w2 = jax.random.uniform(k3, (hidden_size, output_size), jnp.float32,
                            -bound2, bound2)
    b2 = jax.random.uniform(k4, (output_size,), jnp.float32, -bound2, bound2)
    return w1, b1, w2, b2


if __name__ == "__main__":
    key = jax.random.PRNGKey(0)
    k_x, k_p = jax.random.split(key)

    # Small shapes consistent with QNet(input_size, hidden_size, output_size).
    batch, input_size, hidden_size, output_size = 8, 16, 32, 4

    x = jax.random.normal(k_x, (batch, input_size), dtype=jnp.float32)
    w1, b1, w2, b2 = init_qnet_params(k_p, input_size, hidden_size, output_size)

    ref = jnp.maximum(x @ w1 + b1, 0.0) @ w2 + b2

    # One-time parameter prep (pad + optional cast), reused across calls.
    params_f32 = prepare_qnet_params(w1, b1, w2, b2)
    params_bf16 = prepare_qnet_params(w1, b1, w2, b2, mxu_dtype=jnp.bfloat16)

    # 1) f32 path (matches the PyTorch f32 forward).
    out = jax.block_until_ready(qnet_forward(x, params_f32))
    assert out.shape == (batch, output_size)
    assert jnp.allclose(out, ref, atol=1e-5, rtol=1e-5)

    # 2) bf16 MXU-feed path (f32 accumulate + epilogue) -- looser tolerance.
    out_bf16 = jax.block_until_ready(qnet_forward(x, params_bf16))
    assert out_bf16.shape == (batch, output_size)
    assert jnp.allclose(out_bf16, ref, atol=5e-2, rtol=5e-2)

    # 3) Larger, non-tile-multiple batch: exercises the gridded path with a
    #    ragged last tile (no wrapper-side batch padding).
    x_big = jax.random.normal(jax.random.PRNGKey(1), (1000, input_size),
                              dtype=jnp.float32)
    out_big = jax.block_until_ready(qnet_forward(x_big, params_f32))
    ref_big = jnp.maximum(x_big @ w1 + b1, 0.0) @ w2 + b2
    assert out_big.shape == (1000, output_size)
    assert jnp.allclose(out_big, ref_big, atol=1e-4, rtol=1e-4)

    # 4) Explicit user-supplied (odd) block_b is rounded to a legal tile.
    out_blk = jax.block_until_ready(qnet_forward(x_big, params_f32, block_b=200))
    assert jnp.allclose(out_blk, ref_big, atol=1e-4, rtol=1e-4)

    # TODO(synk): QNet.save (torch.save to ./model) is filesystem checkpointing,
    # not part of the forward pass -- intentionally not translated.
    print("KERNEL_OK")
</pallas_src>

<mosaic_0001>
module attributes {stable_mosaic.version = 11 : i64} {
  func.func @qnet_kernel(%arg0: i32, %arg1: memref<8x16xf32, #tpu.memory_space<vmem>>, %arg2: memref<16x128xf32, #tpu.memory_space<vmem>>, %arg3: memref<1x128xf32, #tpu.memory_space<vmem>>, %arg4: memref<128x128xf32, #tpu.memory_space<vmem>>, %arg5: memref<1x128xf32, #tpu.memory_space<vmem>>, %arg6: memref<8x4xf32, #tpu.memory_space<vmem>>) attributes {dimension_semantics = [#tpu.dimension_semantics<parallel>], iteration_bounds = array<i64: 1>, scalar_prefetch = 0 : i64, scratch_operands = 0 : i64, tpu.core_type = #tpu.core_type<tc>, window_params = [{transform_indices = @transform_0, window_bounds = array<i64: 8, 16>}, {pipeline_mode = #tpu.pipeline_mode<synchronous>, transform_indices = @transform_1, window_bounds = array<i64: 16, 128>}, {pipeline_mode = #tpu.pipeline_mode<synchronous>, transform_indices = @transform_2, window_bounds = array<i64: 1, 128>}, {pipeline_mode = #tpu.pipeline_mode<synchronous>, transform_indices = @transform_3, window_bounds = array<i64: 128, 128>}, {pipeline_mode = #tpu.pipeline_mode<synchronous>, transform_indices = @transform_4, window_bounds = array<i64: 1, 128>}, {transform_indices = @transform_5, window_bounds = array<i64: 8, 4>}]} {
    %c0 = arith.constant 0 : index
    %c0_0 = arith.constant 0 : index
    %0 = vector.load %arg1[%c0, %c0_0] : memref<8x16xf32, #tpu.memory_space<vmem>>, vector<8x16xf32>
    %c0_1 = arith.constant 0 : index
    %c0_2 = arith.constant 0 : index
    %1 = vector.load %arg2[%c0_1, %c0_2] : memref<16x128xf32, #tpu.memory_space<vmem>>, vector<16x128xf32>
    %cst = arith.constant dense<0.000000e+00> : vector<8x128xf32>
    %2 = tpu.matmul %0, %1, %cst {dimension_numbers = #tpu.dot_dimension_numbers<[1], [0], [0], [1], [0, 0, 1, 1], [], []>} : vector<8x16xf32>, vector<16x128xf32>, vector<8x128xf32> -> vector<8x128xf32>
    %c0_3 = arith.constant 0 : index
    %c0_4 = arith.constant 0 : index
    %3 = vector.load %arg3[%c0_3, %c0_4] : memref<1x128xf32, #tpu.memory_space<vmem>>, vector<1x128xf32>
    %4 = vector.broadcast %3 : vector<1x128xf32> to vector<8x128xf32>
    %5 = arith.addf %2, %4 : vector<8x128xf32>
    %cst_5 = arith.constant 0.000000e+00 : f32
    %6 = vector.broadcast %cst_5 : f32 to vector<8x128xf32>
    %7 = arith.maximumf %5, %6 : vector<8x128xf32>
    %c0_6 = arith.constant 0 : index
    %c0_7 = arith.constant 0 : index
    %8 = vector.load %arg4[%c0_6, %c0_7] : memref<128x128xf32, #tpu.memory_space<vmem>>, vector<128x128xf32>
    %cst_8 = arith.constant dense<0.000000e+00> : vector<8x128xf32>
    %9 = tpu.matmul %7, %8, %cst_8 {dimension_numbers = #tpu.dot_dimension_numbers<[1], [0], [0], [1], [0, 0, 1, 1], [], []>} : vector<8x128xf32>, vector<128x128xf32>, vector<8x128xf32> -> vector<8x128xf32>
    %c0_9 = arith.constant 0 : index
    %c0_10 = arith.constant 0 : index
    %10 = vector.load %arg5[%c0_9, %c0_10] : memref<1x128xf32, #tpu.memory_space<vmem>>, vector<1x128xf32>
    %11 = vector.broadcast %10 : vector<1x128xf32> to vector<8x128xf32>
    %12 = arith.addf %9, %11 : vector<8x128xf32>
    %13 = vector.extract_strided_slice %12 {offsets = [0, 0], sizes = [8, 4], strides = [1, 1]} : vector<8x128xf32> to vector<8x4xf32>
    %c0_11 = arith.constant 0 : index
    %c0_12 = arith.constant 0 : index
    %14 = vector.load %arg6[%c0_11, %c0_12] : memref<8x4xf32, #tpu.memory_space<vmem>>, vector<8x4xf32>
    tpu.vector_store %arg6[%c0_11, %c0_12], %13 {strides = array<i32>} : memref<8x4xf32, #tpu.memory_space<vmem>>, vector<8x4xf32>,
    return
  }
  func.func @transform_0(%arg0: i32) -> (i32, i32) {
    %c0_i32 = arith.constant 0 : i32
    %c0_i32_0 = arith.constant 0 : i32
    return %arg0, %c0_i32 : i32, i32
  }
  func.func @transform_1(%arg0: i32) -> (i32, i32) {
    %c0_i32 = arith.constant 0 : i32
    %c0_i32_0 = arith.constant 0 : i32
    %c0_i32_1 = arith.constant 0 : i32
    return %c0_i32, %c0_i32_0 : i32, i32
  }
  func.func @transform_2(%arg0: i32) -> (i32, i32) {
    %c0_i32 = arith.constant 0 : i32
    %c0_i32_0 = arith.constant 0 : i32
    %c0_i32_1 = arith.constant 0 : i32
    return %c0_i32, %c0_i32_0 : i32, i32
  }
  func.func @transform_3(%arg0: i32) -> (i32, i32) {
    %c0_i32 = arith.constant 0 : i32
    %c0_i32_0 = arith.constant 0 : i32
    %c0_i32_1 = arith.constant 0 : i32
    return %c0_i32, %c0_i32_0 : i32, i32
  }
  func.func @transform_4(%arg0: i32) -> (i32, i32) {
    %c0_i32 = arith.constant 0 : i32
    %c0_i32_0 = arith.constant 0 : i32
    %c0_i32_1 = arith.constant 0 : i32
    return %c0_i32, %c0_i32_0 : i32, i32
  }
  func.func @transform_5(%arg0: i32) -> (i32, i32) {
    %c0_i32 = arith.constant 0 : i32
    %c0_i32_0 = arith.constant 0 : i32
    return %arg0, %c0_i32 : i32, i32
  }
}

module attributes {stable_mosaic.version = 11 : i64} {
  func.func @qnet_kernel(%arg0: i32, %arg1: memref<8x16xf32, #tpu.memory_space<vmem>>, %arg2: memref<16x128xf32, #tpu.memory_space<vmem>>, %arg3: memref<1x128xf32, #tpu.memory_space<vmem>>, %arg4: memref<128x128xf32, #tpu.memory_space<vmem>>, %arg5: memref<1x128xf32, #tpu.memory_space<vmem>>, %arg6: memref<8x4xf32, #tpu.memory_space<vmem>>) attributes {dimension_semantics = [#tpu.dimension_semantics<parallel>], iteration_bounds = array<i64: 1>, scalar_prefetch = 0 : i64, scratch_operands = 0 : i64, tpu.core_type = #tpu.core_type<tc>, window_params = [{transform_indices = @transform_0, window_bounds = array<i64: 8, 16>}, {pipeline_mode = #tpu.pipeline_mode<synchronous>, transform_indices = @transform_1, window_bounds = array<i64: 16, 128>}, {pipeline_mode = #tpu.pipeline_mode<synchronous>, transform_indices = @transform_2, window_bounds = array<i64: 1, 128>}, {pipeline_mode = #tpu.pipeline_mode<synchronous>, transform_indices = @transform_3, window_bounds = array<i64: 128, 128>}, {pipeline_mode = #tpu.pipeline_mode<synchronous>, transform_indices = @transform_4, window_bounds = array<i64: 1, 128>}, {transform_indices = @transform_5, window_bounds = array<i64: 8, 4>}]} {
    %c0 = arith.constant 0 : index
    %c0_0 = arith.constant 0 : index
    %0 = vector.load %arg1[%c0, %c0_0] : memref<8x16xf32, #tpu.memory_space<vmem>>, vector<8x16xf32>
    %c0_1 = arith.constant 0 : index
    %c0_2 = arith.constant 0 : index
    %1 = vector.load %arg2[%c0_1, %c0_2] : memref<16x128xf32, #tpu.memory_space<vmem>>, vector<16x128xf32>
    %cst = arith.constant dense<0.000000e+00> : vector<8x128xf32>
    %2 = tpu.matmul %0, %1, %cst {dimension_numbers = #tpu.dot_dimension_numbers<[1], [0], [0], [1], [0, 0, 1, 1], [], []>} : vector<8x16xf32>, vector<16x128xf32>, vector<8x128xf32> -> vector<8x128xf32>
    %c0_3 = arith.constant 0 : index
    %c0_4 = arith.constant 0 : index
    %3 = vector.load %arg3[%c0_3, %c0_4] : memref<1x128xf32, #tpu.memory_space<vmem>>, vector<1x128xf32>
    %4 = vector.broadcast %3 : vector<1x128xf32> to vector<8x128xf32>
    %5 = arith.addf %2, %4 : vector<8x128xf32>
    %cst_5 = arith.constant 0.000000e+00 : f32
    %6 = vector.broadcast %cst_5 : f32 to vector<8x128xf32>
    %7 = arith.maximumf %5, %6 : vector<8x128xf32>
    %c0_6 = arith.constant 0 : index
    %c0_7 = arith.constant 0 : index
    %8 = vector.load %arg4[%c0_6, %c0_7] : memref<128x128xf32, #tpu.memory_space<vmem>>, vector<128x128xf32>
    %cst_8 = arith.constant dense<0.000000e+00> : vector<8x128xf32>
    %9 = tpu.matmul %7, %8, %cst_8 {dimension_numbers = #tpu.dot_dimension_numbers<[1], [0], [0], [1], [0, 0, 1, 1], [], []>} : vector<8x128xf32>, vector<128x128xf32>, vector<8x128xf32> -> vector<8x128xf32>
    %c0_9 = arith.constant 0 : index
    %c0_10 = arith.constant 0 : index
    %10 = vector.load %arg5[%c0_9, %c0_10] : memref<1x128xf32, #tpu.memory_space<vmem>>, vector<1x128xf32>
    %11 = vector.broadcast %10 : vector<1x128xf32> to vector<8x128xf32>
    %12 = arith.addf %9, %11 : vector<8x128xf32>
    %13 = vector.extract_strided_slice %12 {offsets = [0, 0], sizes = [8, 4], strides = [1, 1]} : vector<8x128xf32> to vector<8x4xf32>
    %c0_11 = arith.constant 0 : index
    %c0_12 = arith.constant 0 : index
    %14 = vector.load %arg6[%c0_11, %c0_12] : memref<8x4xf32, #tpu.memory_space<vmem>>, vector<8x4xf32>
    tpu.vector_store %arg6[%c0_11, %c0_12], %13 {strides = array<i32>} : memref<8x4xf32, #tpu.memory_space<vmem>>, vector<8x4xf32>,
    return
  }
  func.func @transform_0(%arg0: i32) -> (i32, i32) {
    %c0_i32 = arith.constant 0 : i32
    %c0_i32_0 = arith.constant 0 : i32
    return %arg0, %c0_i32 : i32, i32
  }
  func.func @transform_1(%arg0: i32) -> (i32, i32) {
    %c0_i32 = arith.constant 0 : i32
    %c0_i32_0 = arith.constant 0 : i32
    %c0_i32_1 = arith.constant 0 : i32
    return %c0_i32, %c0_i32_0 : i32, i32
  }
  func.func @transform_2(%arg0: i32) -> (i32, i32) {
    %c0_i32 = arith.constant 0 : i32
    %c0_i32_0 = arith.constant 0 : i32
    %c0_i32_1 = arith.constant 0 : i32
    return %c0_i32, %c0_i32_0 : i32, i32
  }
  func.func @transform_3(%arg0: i32) -> (i32, i32) {
    %c0_i32 = arith.constant 0 : i32
    %c0_i32_0 = arith.constant 0 : i32
    %c0_i32_1 = arith.constant 0 : i32
    return %c0_i32, %c0_i32_0 : i32, i32
  }
  func.func @transform_4(%arg0: i32) -> (i32, i32) {
    %c0_i32 = arith.constant 0 : i32
    %c0_i32_0 = arith.constant 0 : i32
    %c0_i32_1 = arith.constant 0 : i32
    return %c0_i32, %c0_i32_0 : i32, i32
  }
  func.func @transform_5(%arg0: i32) -> (i32, i32) {
    %c0_i32 = arith.constant 0 : i32
    %c0_i32_0 = arith.constant 0 : i32
    return %arg0, %c0_i32 : i32, i32
  }
}

</mosaic_0001>

<llo_original>
// kernel: tpu_custom_call.1
$region0: #{tpu_custom_call.1}
  #allocation0 [shape = 'u32[]', space=smem, size = 0x4, offset = 0x4, fixed_abs, tag = 'smem constant byte address 0x4 - core index']
  #allocation1 [shape = 'u32[144,128]{1,0:T(1,128)}', space=vmem, size = 0x12000, scoped, tag = 'internal scratch']
  %s0 = inlined_call_operand.hbm [shape: f32[8,16], index: 0, kind: input, shape index: {}]
  %s1 = inlined_call_operand.hbm [shape: f32[16,128], index: 1, kind: input, shape index: {}]
  %s2 = inlined_call_operand.vmem [shape: f32[1,128], index: 2, kind: input, shape index: {}]
  %s3 = inlined_call_operand.hbm [shape: f32[128,128], index: 3, kind: input, shape index: {}]
  %s4 = inlined_call_operand.vmem [shape: f32[1,128], index: 4, kind: input, shape index: {}]
  %s5 = inlined_call_operand.vmem [shape: f32[8,4], index: 5, kind: output, shape index: {}]
  %s6 = sld [smem:[#allocation0]]
  $region42: #{tpu_custom_call.1} parent=0
    _
  %s8 = ssub.s32 1, %s6
  %s9 = scalar_select 0, %s8, %s6
  $region1: #{tpu_custom_call.1} parent=0
    #allocation2 [shape = 'u8[4096]{0}', space=vmem, size = 0x1000, scoped, tag = 'input window, operand 0, single buffered']
    #allocation3 [shape = 's32[1]{0}', space=sflag, size = 0x4, scoped, tag = 'scoped memory for tpu_custom_call.1']
    #allocation4 [shape = 'u8[8192]{0}', space=vmem, size = 0x2000, scoped, tag = 'input window, operand 1, single buffered']
    #allocation5 [shape = 's32[1]{0}', space=sflag, size = 0x4, scoped, tag = 'scoped memory for tpu_custom_call.1']
    #allocation6 [shape = 'u8[65536]{0}', space=vmem, size = 0x10000, scoped, tag = 'input window, operand 3, single buffered']
    %10 = vsyncpa [#allocation3], 0
    %11 = vsyncpa [#allocation5], 0
    // Predicated region
    $region2: #{tpu_custom_call.1} parent=1 // pred_check
      _
    $region3: #{tpu_custom_call.1} parent=1 // pred_check_branch
      %13 = sbr.rel (0) target = $region5
    $region4: #{tpu_custom_call.1} parent=1 // pred_region
      %s15 = ssub.s32 128, 128
      %16 = vsyncadd [#allocation3], %s15
      %s18 = sshll.u32 [#allocation2], 4
      %s19 = int_to_ptr.vmem [resolvable:$true] %s18
      %21 = dma.hbm_to_vmem [thread:$0]  %s0, 128, %s19, [#allocation3]
    $region5: #{tpu_custom_call.1} parent=1 // pred_fallthru
      _
    // Predicated region
    $region6: #{tpu_custom_call.1} parent=1 // pred_check
      _
    $region7: #{tpu_custom_call.1} parent=1 // pred_check_branch
      %23 = sbr.rel (0) target = $region9
    $region8: #{tpu_custom_call.1} parent=1 // pred_region
      %s25 = ssub.s32 256, 256
      %26 = vsyncadd [#allocation5], %s25
      %s27 = sshll.u32 [#allocation4], 4
      %s28 = int_to_ptr.vmem [resolvable:$true] %s27
      %33 = dma.hbm_to_vmem [thread:$0]  %s1, 256, %s28, [#allocation5], 128, 128, 8
    $region9: #{tpu_custom_call.1} parent=1 // pred_fallthru
      _
    // Predicated region
    $region10: #{tpu_custom_call.1} parent=1 // pred_check
      _
    $region11: #{tpu_custom_call.1} parent=1 // pred_check_branch
      %35 = sbr.rel (0) target = $region13
    $region12: #{tpu_custom_call.1} parent=1 // pred_region
      _
    $region13: #{tpu_custom_call.1} parent=1 // pred_fallthru
      _
    // Predicated region
    $region14: #{tpu_custom_call.1} parent=1 // pred_check
      _
    $region15: #{tpu_custom_call.1} parent=1 // pred_check_branch
      %37 = sbr.rel (0) target = $region17
    $region16: #{tpu_custom_call.1} parent=1 // pred_region
      %s39 = ssub.s32 2048, 2048
      %40 = vsyncadd [#allocation5], %s39
      %s41 = sshll.u32 [#allocation6], 4
      %s42 = int_to_ptr.vmem [resolvable:$true] %s41
      %47 = dma.hbm_to_vmem [thread:$0]  %s3, 2048, %s42, [#allocation5], 128, 128, 8
    $region17: #{tpu_custom_call.1} parent=1 // pred_fallthru
      _
    // Predicated region
    $region18: #{tpu_custom_call.1} parent=1 // pred_check
      _
    $region19: #{tpu_custom_call.1} parent=1 // pred_check_branch
      %49 = sbr.rel (0) target = $region21
    $region20: #{tpu_custom_call.1} parent=1 // pred_region
      _
    $region21: #{tpu_custom_call.1} parent=1 // pred_fallthru
      _
    // Predicated region
    $region22: #{tpu_custom_call.1} parent=1 // pred_check
      _
    $region23: #{tpu_custom_call.1} parent=1 // pred_check_branch
      %51 = sbr.rel (0) target = $region25
    $region24: #{tpu_custom_call.1} parent=1 // pred_region
      %52 = dma.done [#allocation3], 128
    $region25: #{tpu_custom_call.1} parent=1 // pred_fallthru
      _
    // Predicated region
    $region26: #{tpu_custom_call.1} parent=1 // pred_check
      _
    $region27: #{tpu_custom_call.1} parent=1 // pred_check_branch
      %54 = sbr.rel (0) target = $region29
    $region28: #{tpu_custom_call.1} parent=1 // pred_region
      %55 = dma.done [#allocation5], 256
    $region29: #{tpu_custom_call.1} parent=1 // pred_fallthru
      _
    // Predicated region
    $region30: #{tpu_custom_call.1} parent=1 // pred_check
      _
    $region31: #{tpu_custom_call.1} parent=1 // pred_check_branch
      %57 = sbr.rel (0) target = $region33
    $region32: #{tpu_custom_call.1} parent=1 // pred_region
      %58 = dma.done [#allocation5], 2048
    $region33: #{tpu_custom_call.1} parent=1 // pred_fallthru
      _
    %v59 = vld [vmem:[#allocation2] sm:$0xff]
    %v60 = vld [vmem:[#allocation4] sm:$0xff]
    %v61 = vld [vmem:[#allocation4 + $0x8] sm:$0xff]
    %v62 = vld [vmem:[%s2] sm:$0x1]
    %v64 = vlaneseq
    %v65 = vshrl.u32 %v64, 7
    %v66 = vsub.s32 0, %v65
    %v67 = vrot.slane %v62, %v66
    %vm69 = vcmask 130048
    %v71 = vsel %vm69, %v59, 0
    %73 = vmatprep.subr.mxu0 0.0
    %74 = vmatpush1.msra.mxu0 0.0
    %75 = vmatprep.subr.mxu0 0.0
    %76 = vmatpush1.msra.mxu0 0.0
    %77 = vmatprep.subr.mxu0 0.0
    %78 = vmatpush1.msra.mxu0 0.0
    %79 = vmatprep.subr.mxu0 0.0
    %80 = vmatpush1.msra.mxu0 0.0
    %81 = vmatprep.subr.mxu0 0.0
    %82 = vmatpush1.msra.mxu0 0.0
    %83 = vmatprep.subr.mxu0 0.0
    %84 = vmatpush1.msra.mxu0 0.0
    %85 = vmatprep.subr.mxu0 0.0
    %86 = vmatpush1.msra.mxu0 0.0
    %87 = vmatprep.subr.mxu0 0.0
    %88 = vmatpush1.msra.mxu0 0.0
    %89 = vmatprep.subr.mxu0 0.0
    %90 = vmatpush1.msra.mxu0 0.0
    %91 = vmatprep.subr.mxu0 0.0
    %92 = vmatpush1.msra.mxu0 0.0
    %93 = vmatprep.subr.mxu0 0.0
    %94 = vmatpush1.msra.mxu0 0.0
    %95 = vmatprep.subr.mxu0 0.0
    %96 = vmatpush1.msra.mxu0 0.0
    %97 = vmatprep.subr.mxu0 0.0
    %98 = vmatpush1.msra.mxu0 0.0
    %99 = vmatprep.subr.mxu0 0.0
    %100 = vmatpush1.msra.mxu0 0.0
    %101 = vmatprep.subr.mxu0 0.0
    %102 = vmatpush1.msra.mxu0 %v61
    %103 = vmatprep.subr.mxu0 0.0
    %104 = vmatpush1.msra.mxu0 %v60
    %105 = vmatprep.subr.mxu0 0.0
    %106 = vmatpush2.msra.mxu0 0.0
    %107 = vmatprep.subr.mxu0 0.0
    %108 = vmatpush2.msra.mxu0 0.0
    %109 = vmatprep.subr.mxu0 0.0
    %110 = vmatpush2.msra.mxu0 0.0
    %111 = vmatprep.subr.mxu0 0.0
    %112 = vmatpush2.msra.mxu0 0.0
    %113 = vmatprep.subr.mxu0 0.0
    %114 = vmatpush2.msra.mxu0 0.0
    %115 = vmatprep.subr.mxu0 0.0
    %116 = vmatpush2.msra.mxu0 0.0
    %117 = vmatprep.subr.mxu0 0.0
    %118 = vmatpush2.msra.mxu0 0.0
    %119 = vmatprep.subr.mxu0 0.0
    %120 = vmatpush2.msra.mxu0 0.0
    %121 = vmatprep.subr.mxu0 0.0
    %122 = vmatpush2.msra.mxu0 0.0
    %123 = vmatprep.subr.mxu0 0.0
    %124 = vmatpush2.msra.mxu0 0.0
    %125 = vmatprep.subr.mxu0 0.0
    %126 = vmatpush2.msra.mxu0 0.0
    %127 = vmatprep.subr.mxu0 0.0
    %128 = vmatpush2.msra.mxu0 0.0
    %129 = vmatprep.subr.mxu0 0.0
    %130 = vmatpush2.msra.mxu0 0.0
    %131 = vmatprep.subr.mxu0 0.0
    %132 = vmatpush2.msra.mxu0 0.0
    %133 = vmatprep.subr.mxu0 0.0
    %134 = vmatpush2.msra.mxu0 0.0
    %135 = vmatprep.subr.mxu0 0.0
    %136 = vmatpush2.msra.mxu0 0.0
    %137 = vmatprep.mubr.f32.mxu0 0.0
    %138 = vmatmul.mubr.f32.gmra.mxu0 %v71
    %v139 = vpop.f32.mrf.mxu0
    %v140 = vadd.f32 %v67, %v139
    %v141 = vpop.f32.mrf.mxu0
    %142 = vdwg.mxu0
    %v143 = vmax.f32 %v140, 0.0
    %v144 = vld [vmem:[#allocation6] sm:$0xff]
    %v145 = vld [vmem:[#allocation6 + $0x8] sm:$0xff]
    %v146 = vld [vmem:[#allocation6 + $0x10] sm:$0xff]
    %v147 = vld [vmem:[#allocation6 + $0x18] sm:$0xff]
    %v148 = vld [vmem:[#allocation6 + $0x20] sm:$0xff]
    %v149 = vld [vmem:[#allocation6 + $0x28] sm:$0xff]
    %v150 = vld [vmem:[#allocation6 + $0x30] sm:$0xff]
    %v151 = vld [vmem:[#allocation6 + $0x38] sm:$0xff]
    %v152 = vld [vmem:[#allocation6 + $0x40] sm:$0xff]
    %v153 = vld [vmem:[#allocation6 + $0x48] sm:$0xff]
    %v154 = vld [vmem:[#allocation6 + $0x50] sm:$0xff]
    %v155 = vld [vmem:[#allocation6 + $0x58] sm:$0xff]
    %v156 = vld [vmem:[#allocation6 + $0x60] sm:$0xff]
    %v157 = vld [vmem:[#allocation6 + $0x68] sm:$0xff]
    %v158 = vld [vmem:[#allocation6 + $0x70] sm:$0xff]
    %v159 = vld [vmem:[#allocation6 + $0x78] sm:$0xff]
    %v160 = vld [vmem:[%s4] sm:$0x1]
    %v162 = vlaneseq
    %v163 = vshrl.u32 %v162, 7
    %v164 = vsub.s32 0, %v163
    %v165 = vrot.slane %v160, %v164
    %167 = vmatprep.subr.mxu0 0.0
    %168 = vmatpush1.msra.mxu0 %v159
    %169 = vmatprep.subr.mxu0 0.0
    %170 = vmatpush1.msra.mxu0 %v158
    %171 = vmatprep.subr.mxu0 0.0
    %172 = vmatpush1.msra.mxu0 %v157
    %173 = vmatprep.subr.mxu0 0.0
    %174 = vmatpush1.msra.mxu0 %v156
    %175 = vmatprep.subr.mxu0 0.0
    %176 = vmatpush1.msra.mxu0 %v155
    %177 = vmatprep.subr.mxu0 0.0
    %178 = vmatpush1.msra.mxu0 %v154
    %179 = vmatprep.subr.mxu0 0.0
    %180 = vmatpush1.msra.mxu0 %v153
    %181 = vmatprep.subr.mxu0 0.0
    %182 = vmatpush1.msra.mxu0 %v152
    %183 = vmatprep.subr.mxu0 0.0
    %184 = vmatpush1.msra.mxu0 %v151
    %185 = vmatprep.subr.mxu0 0.0
    %186 = vmatpush1.msra.mxu0 %v150
    %187 = vmatprep.subr.mxu0 0.0
    %188 = vmatpush1.msra.mxu0 %v149
    %189 = vmatprep.subr.mxu0 0.0
    %190 = vmatpush1.msra.mxu0 %v148
    %191 = vmatprep.subr.mxu0 0.0
    %192 = vmatpush1.msra.mxu0 %v147
    %193 = vmatprep.subr.mxu0 0.0
    %194 = vmatpush1.msra.mxu0 %v146
    %195 = vmatprep.subr.mxu0 0.0
    %196 = vmatpush1.msra.mxu0 %v145
    %197 = vmatprep.subr.mxu0 0.0
    %198 = vmatpush1.msra.mxu0 %v144
    %199 = vmatprep.subr.mxu0 0.0
    %200 = vmatpush2.msra.mxu0 0.0
    %201 = vmatprep.subr.mxu0 0.0
    %202 = vmatpush2.msra.mxu0 0.0
    %203 = vmatprep.subr.mxu0 0.0
    %204 = vmatpush2.msra.mxu0 0.0
    %205 = vmatprep.subr.mxu0 0.0
    %206 = vmatpush2.msra.mxu0 0.0
    %207 = vmatprep.subr.mxu0 0.0
    %208 = vmatpush2.msra.mxu0 0.0
    %209 = vmatprep.subr.mxu0 0.0
    %210 = vmatpush2.msra.mxu0 0.0
    %211 = vmatprep.subr.mxu0 0.0
    %212 = vmatpush2.msra.mxu0 0.0
    %213 = vmatprep.subr.mxu0 0.0
    %214 = vmatpush2.msra.mxu0 0.0
    %215 = vmatprep.subr.mxu0 0.0
    %216 = vmatpush2.msra.mxu0 0.0
    %217 = vmatprep.subr.mxu0 0.0
    %218 = vmatpush2.msra.mxu0 0.0
    %219 = vmatprep.subr.mxu0 0.0
    %220 = vmatpush2.msra.mxu0 0.0
    %221 = vmatprep.subr.mxu0 0.0
    %222 = vmatpush2.msra.mxu0 0.0
    %223 = vmatprep.subr.mxu0 0.0
    %224 = vmatpush2.msra.mxu0 0.0
    %225 = vmatprep.subr.mxu0 0.0
    %226 = vmatpush2.msra.mxu0 0.0
    %227 = vmatprep.subr.mxu0 0.0
    %228 = vmatpush2.msra.mxu0 0.0
    %229 = vmatprep.subr.mxu0 0.0
    %230 = vmatpush2.msra.mxu0 0.0
    %231 = vmatprep.mubr.f32.mxu0 0.0
    %232 = vmatmul.mubr.f32.gmra.mxu0 %v143
    %v233 = vpop.f32.mrf.mxu0
    %v234 = vadd.f32 %v165, %v233
    %v235 = vpop.f32.mrf.mxu0
    %236 = vdwg.mxu0
    %vm237 = vcmask 31744
    %238 = vst.msk [vmem:[%s5] sm:$0xff] %vm237, %v234
    // Predicated region
    $region34: #{tpu_custom_call.1} parent=1 // pred_check
      _
    $region35: #{tpu_custom_call.1} parent=1 // pred_check_branch
      %240 = sbr.rel (0) target = $region37
    $region36: #{tpu_custom_call.1} parent=1 // pred_region
      _
    $region37: #{tpu_custom_call.1} parent=1 // pred_fallthru
      _
    // Predicated region
    $region38: #{tpu_custom_call.1} parent=1 // pred_check
      _
    $region39: #{tpu_custom_call.1} parent=1 // pred_check_branch
      %242 = sbr.rel (0) target = $region41
    $region40: #{tpu_custom_call.1} parent=1 // pred_region
      _
    $region41: #{tpu_custom_call.1} parent=1 // pred_fallthru
      _
    %243 = vsyncpa [#allocation3], 1
    %244 = vsyncpa [#allocation5], 1

// kernel: tpu_custom_call.1
$region0: #{tpu_custom_call.1}
  #allocation0 [shape = 'u32[]', space=smem, size = 0x4, offset = 0x4, fixed_abs, tag = 'smem constant byte address 0x4 - core index']
  #allocation1 [shape = 'u32[144,128]{1,0:T(1,128)}', space=vmem, size = 0x12000, scoped, tag = 'internal scratch']
  %s0 = inlined_call_operand.hbm [shape: f32[8,16], index: 0, kind: input, shape index: {}]
  %s1 = inlined_call_operand.hbm [shape: f32[16,128], index: 1, kind: input, shape index: {}]
  %s2 = inlined_call_operand.vmem [shape: f32[1,128], index: 2, kind: input, shape index: {}]
  %s3 = inlined_call_operand.hbm [shape: f32[128,128], index: 3, kind: input, shape index: {}]
  %s4 = inlined_call_operand.vmem [shape: f32[1,128], index: 4, kind: input, shape index: {}]
  %s5 = inlined_call_operand.vmem [shape: f32[8,4], index: 5, kind: output, shape index: {}]
  %s6 = sld [smem:[#allocation0]]
  $region42: #{tpu_custom_call.1} parent=0
    _
  %s8 = ssub.s32 1, %s6
  %s9 = scalar_select 0, %s8, %s6
  $region1: #{tpu_custom_call.1} parent=0
    #allocation2 [shape = 'u8[4096]{0}', space=vmem, size = 0x1000, scoped, tag = 'input window, operand 0, single buffered']
    #allocation3 [shape = 's32[1]{0}', space=sflag, size = 0x4, scoped, tag = 'scoped memory for tpu_custom_call.1']
    #allocation4 [shape = 'u8[8192]{0}', space=vmem, size = 0x2000, scoped, tag = 'input window, operand 1, single buffered']
    #allocation5 [shape = 's32[1]{0}', space=sflag, size = 0x4, scoped, tag = 'scoped memory for tpu_custom_call.1']
    #allocation6 [shape = 'u8[65536]{0}', space=vmem, size = 0x10000, scoped, tag = 'input window, operand 3, single buffered']
    %10 = vsyncpa [#allocation3], 0
    %11 = vsyncpa [#allocation5], 0
    // Predicated region
    $region2: #{tpu_custom_call.1} parent=1 // pred_check
      _
    $region3: #{tpu_custom_call.1} parent=1 // pred_check_branch
      %13 = sbr.rel (0) target = $region5
    $region4: #{tpu_custom_call.1} parent=1 // pred_region
      %s15 = ssub.s32 128, 128
      %16 = vsyncadd [#allocation3], %s15
      %s18 = sshll.u32 [#allocation2], 4
      %s19 = int_to_ptr.vmem [resolvable:$true] %s18
      %21 = dma.hbm_to_vmem [thread:$0]  %s0, 128, %s19, [#allocation3]
    $region5: #{tpu_custom_call.1} parent=1 // pred_fallthru
      _
    // Predicated region
    $region6: #{tpu_custom_call.1} parent=1 // pred_check
      _
    $region7: #{tpu_custom_call.1} parent=1 // pred_check_branch
      %23 = sbr.rel (0) target = $region9
    $region8: #{tpu_custom_call.1} parent=1 // pred_region
      %s25 = ssub.s32 256, 256
      %26 = vsyncadd [#allocation5], %s25
      %s27 = sshll.u32 [#allocation4], 4
      %s28 = int_to_ptr.vmem [resolvable:$true] %s27
      %33 = dma.hbm_to_vmem [thread:$0]  %s1, 256, %s28, [#allocation5], 128, 128, 8
    $region9: #{tpu_custom_call.1} parent=1 // pred_fallthru
      _
    // Predicated region
    $region10: #{tpu_custom_call.1} parent=1 // pred_check
      _
    $region11: #{tpu_custom_call.1} parent=1 // pred_check_branch
      %35 = sbr.rel (0) target = $region13
    $region12: #{tpu_custom_call.1} parent=1 // pred_region
      _
    $region13: #{tpu_custom_call.1} parent=1 // pred_fallthru
      _
    // Predicated region
    $region14: #{tpu_custom_call.1} parent=1 // pred_check
      _
    $region15: #{tpu_custom_call.1} parent=1 // pred_check_branch
      %37 = sbr.rel (0) target = $region17
    $region16: #{tpu_custom_call.1} parent=1 // pred_region
      %s39 = ssub.s32 2048, 2048
      %40 = vsyncadd [#allocation5], %s39
      %s41 = sshll.u32 [#allocation6], 4
      %s42 = int_to_ptr.vmem [resolvable:$true] %s41
      %47 = dma.hbm_to_vmem [thread:$0]  %s3, 2048, %s42, [#allocation5], 128, 128, 8
    $region17: #{tpu_custom_call.1} parent=1 // pred_fallthru
      _
    // Predicated region
    $region18: #{tpu_custom_call.1} parent=1 // pred_check
      _
    $region19: #{tpu_custom_call.1} parent=1 // pred_check_branch
      %49 = sbr.rel (0) target = $region21
    $region20: #{tpu_custom_call.1} parent=1 // pred_region
      _
    $region21: #{tpu_custom_call.1} parent=1 // pred_fallthru
      _
    // Predicated region
    $region22: #{tpu_custom_call.1} parent=1 // pred_check
      _
    $region23: #{tpu_custom_call.1} parent=1 // pred_check_branch
      %51 = sbr.rel (0) target = $region25
    $region24: #{tpu_custom_call.1} parent=1 // pred_region
      %52 = dma.done [#allocation3], 128
    $region25: #{tpu_custom_call.1} parent=1 // pred_fallthru
      _
    // Predicated region
    $region26: #{tpu_custom_call.1} parent=1 // pred_check
      _
    $region27: #{tpu_custom_call.1} parent=1 // pred_check_branch
      %54 = sbr.rel (0) target = $region29
    $region28: #{tpu_custom_call.1} parent=1 // pred_region
      %55 = dma.done [#allocation5], 256
    $region29: #{tpu_custom_call.1} parent=1 // pred_fallthru
      _
    // Predicated region
    $region30: #{tpu_custom_call.1} parent=1 // pred_check
      _
    $region31: #{tpu_custom_call.1} parent=1 // pred_check_branch
      %57 = sbr.rel (0) target = $region33
    $region32: #{tpu_custom_call.1} parent=1 // pred_region
      %58 = dma.done [#allocation5], 2048
    $region33: #{tpu_custom_call.1} parent=1 // pred_fallthru
      _
    %v59 = vld [vmem:[#allocation2] sm:$0xff]
    %v60 = vld [vmem:[#allocation4] sm:$0xff]
    %v61 = vld [vmem:[#allocation4 + $0x8] sm:$0xff]
    %v62 = vld [vmem:[%s2] sm:$0x1]
    %v64 = vlaneseq
    %v65 = vshrl.u32 %v64, 7
    %v66 = vsub.s32 0, %v65
    %v67 = vrot.slane %v62, %v66
    %vm69 = vcmask 130048
    %v71 = vsel %vm69, %v59, 0
    %73 = vmatprep.subr.mxu0 0.0
    %74 = vmatpush1.msra.mxu0 0.0
    %75 = vmatprep.subr.mxu0 0.0
    %76 = vmatpush1.msra.mxu0 0.0
    %77 = vmatprep.subr.mxu0 0.0
    %78 = vmatpush1.msra.mxu0 0.0
    %79 = vmatprep.subr.mxu0 0.0
    %80 = vmatpush1.msra.mxu0 0.0
    %81 = vmatprep.subr.mxu0 0.0
    %82 = vmatpush1.msra.mxu0 0.0
    %83 = vmatprep.subr.mxu0 0.0
    %84 = vmatpush1.msra.mxu0 0.0
    %85 = vmatprep.subr.mxu0 0.0
    %86 = vmatpush1.msra.mxu0 0.0
    %87 = vmatprep.subr.mxu0 0.0
    %88 = vmatpush1.msra.mxu0 0.0
    %89 = vmatprep.subr.mxu0 0.0
    %90 = vmatpush1.msra.mxu0 0.0
    %91 = vmatprep.subr.mxu0 0.0
    %92 = vmatpush1.msra.mxu0 0.0
    %93 = vmatprep.subr.mxu0 0.0
    %94 = vmatpush1.msra.mxu0 0.0
    %95 = vmatprep.subr.mxu0 0.0
    %96 = vmatpush1.msra.mxu0 0.0
    %97 = vmatprep.subr.mxu0 0.0
    %98 = vmatpush1.msra.mxu0 0.0
    %99 = vmatprep.subr.mxu0 0.0
    %100 = vmatpush1.msra.mxu0 0.0
    %101 = vmatprep.subr.mxu0 0.0
    %102 = vmatpush1.msra.mxu0 %v61
    %103 = vmatprep.subr.mxu0 0.0
    %104 = vmatpush1.msra.mxu0 %v60
    %105 = vmatprep.subr.mxu0 0.0
    %106 = vmatpush2.msra.mxu0 0.0
    %107 = vmatprep.subr.mxu0 0.0
    %108 = vmatpush2.msra.mxu0 0.0
    %109 = vmatprep.subr.mxu0 0.0
    %110 = vmatpush2.msra.mxu0 0.0
    %111 = vmatprep.subr.mxu0 0.0
    %112 = vmatpush2.msra.mxu0 0.0
    %113 = vmatprep.subr.mxu0 0.0
    %114 = vmatpush2.msra.mxu0 0.0
    %115 = vmatprep.subr.mxu0 0.0
    %116 = vmatpush2.msra.mxu0 0.0
    %117 = vmatprep.subr.mxu0 0.0
    %118 = vmatpush2.msra.mxu0 0.0
    %119 = vmatprep.subr.mxu0 0.0
    %120 = vmatpush2.msra.mxu0 0.0
    %121 = vmatprep.subr.mxu0 0.0
    %122 = vmatpush2.msra.mxu0 0.0
    %123 = vmatprep.subr.mxu0 0.0
    %124 = vmatpush2.msra.mxu0 0.0
    %125 = vmatprep.subr.mxu0 0.0
    %126 = vmatpush2.msra.mxu0 0.0
    %127 = vmatprep.subr.mxu0 0.0
    %128 = vmatpush2.msra.mxu0 0.0
    %129 = vmatprep.subr.mxu0 0.0
    %130 = vmatpush2.msra.mxu0 0.0
    %131 = vmatprep.subr.mxu0 0.0
    %132 = vmatpush2.msra.mxu0 0.0
    %133 = vmatprep.subr.mxu0 0.0
    %134 = vmatpush2.msra.mxu0 0.0
    %135 = vmatprep.subr.mxu0 0.0
    %136 = vmatpush2.msra.mxu0 0.0
    %137 = vmatprep.mubr.f32.mxu0 0.0
    %138 = vmatmul.mubr.f32.gmra.mxu0 %v71
    %v139 = vpop.f32.mrf.mxu0
    %v140 = vadd.f32 %v67, %v139
    %v141 = vpop.f32.mrf.mxu0
    %142 = vdwg.mxu0
    %v143 = vmax.f32 %v140, 0.0
    %v144 = vld [vmem:[#allocation6] sm:$0xff]
    %v145 = vld [vmem:[#allocation6 + $0x8] sm:$0xff]
    %v146 = vld [vmem:[#allocation6 + $0x10] sm:$0xff]
    %v147 = vld [vmem:[#allocation6 + $0x18] sm:$0xff]
    %v148 = vld [vmem:[#allocation6 + $0x20] sm:$0xff]
    %v149 = vld [vmem:[#allocation6 + $0x28] sm:$0xff]
    %v150 = vld [vmem:[#allocation6 + $0x30] sm:$0xff]
    %v151 = vld [vmem:[#allocation6 + $0x38] sm:$0xff]
    %v152 = vld [vmem:[#allocation6 + $0x40] sm:$0xff]
    %v153 = vld [vmem:[#allocation6 + $0x48] sm:$0xff]
    %v154 = vld [vmem:[#allocation6 + $0x50] sm:$0xff]
    %v155 = vld [vmem:[#allocation6 + $0x58] sm:$0xff]
    %v156 = vld [vmem:[#allocation6 + $0x60] sm:$0xff]
    %v157 = vld [vmem:[#allocation6 + $0x68] sm:$0xff]
    %v158 = vld [vmem:[#allocation6 + $0x70] sm:$0xff]
    %v159 = vld [vmem:[#allocation6 + $0x78] sm:$0xff]
    %v160 = vld [vmem:[%s4] sm:$0x1]
    %v162 = vlaneseq
    %v163 = vshrl.u32 %v162, 7
    %v164 = vsub.s32 0, %v163
    %v165 = vrot.slane %v160, %v164
    %167 = vmatprep.subr.mxu0 0.0
    %168 = vmatpush1.msra.mxu0 %v159
    %169 = vmatprep.subr.mxu0 0.0
    %170 = vmatpush1.msra.mxu0 %v158
    %171 = vmatprep.subr.mxu0 0.0
    %172 = vmatpush1.msra.mxu0 %v157
    %173 = vmatprep.subr.mxu0 0.0
    %174 = vmatpush1.msra.mxu0 %v156
    %175 = vmatprep.subr.mxu0 0.0
    %176 = vmatpush1.msra.mxu0 %v155
    %177 = vmatprep.subr.mxu0 0.0
    %178 = vmatpush1.msra.mxu0 %v154
    %179 = vmatprep.subr.mxu0 0.0
    %180 = vmatpush1.msra.mxu0 %v153
    %181 = vmatprep.subr.mxu0 0.0
    %182 = vmatpush1.msra.mxu0 %v152
    %183 = vmatprep.subr.mxu0 0.0
    %184 = vmatpush1.msra.mxu0 %v151
    %185 = vmatprep.subr.mxu0 0.0
    %186 = vmatpush1.msra.mxu0 %v150
    %187 = vmatprep.subr.mxu0 0.0
    %188 = vmatpush1.msra.mxu0 %v149
    %189 = vmatprep.subr.mxu0 0.0
    %190 = vmatpush1.msra.mxu0 %v148
    %191 = vmatprep.subr.mxu0 0.0
    %192 = vmatpush1.msra.mxu0 %v147
    %193 = vmatprep.subr.mxu0 0.0
    %194 = vmatpush1.msra.mxu0 %v146
    %195 = vmatprep.subr.mxu0 0.0
    %196 = vmatpush1.msra.mxu0 %v145
    %197 = vmatprep.subr.mxu0 0.0
    %198 = vmatpush1.msra.mxu0 %v144
    %199 = vmatprep.subr.mxu0 0.0
    %200 = vmatpush2.msra.mxu0 0.0
    %201 = vmatprep.subr.mxu0 0.0
    %202 = vmatpush2.msra.mxu0 0.0
    %203 = vmatprep.subr.mxu0 0.0
    %204 = vmatpush2.msra.mxu0 0.0
    %205 = vmatprep.subr.mxu0 0.0
    %206 = vmatpush2.msra.mxu0 0.0
    %207 = vmatprep.subr.mxu0 0.0
    %208 = vmatpush2.msra.mxu0 0.0
    %209 = vmatprep.subr.mxu0 0.0
    %210 = vmatpush2.msra.mxu0 0.0
    %211 = vmatprep.subr.mxu0 0.0
    %212 = vmatpush2.msra.mxu0 0.0
    %213 = vmatprep.subr.mxu0 0.0
    %214 = vmatpush2.msra.mxu0 0.0
    %215 = vmatprep.subr.mxu0 0.0
    %216 = vmatpush2.msra.mxu0 0.0
    %217 = vmatprep.subr.mxu0 0.0
    %218 = vmatpush2.msra.mxu0 0.0
    %219 = vmatprep.subr.mxu0 0.0
    %220 = vmatpush2.msra.mxu0 0.0
    %221 = vmatprep.subr.mxu0 0.0
    %222 = vmatpush2.msra.mxu0 0.0
    %223 = vmatprep.subr.mxu0 0.0
    %224 = vmatpush2.msra.mxu0 0.0
    %225 = vmatprep.subr.mxu0 0.0
    %226 = vmatpush2.msra.mxu0 0.0
    %227 = vmatprep.subr.mxu0 0.0
    %228 = vmatpush2.msra.mxu0 0.0
    %229 = vmatprep.subr.mxu0 0.0
    %230 = vmatpush2.msra.mxu0 0.0
    %231 = vmatprep.mubr.f32.mxu0 0.0
    %232 = vmatmul.mubr.f32.gmra.mxu0 %v143
    %v233 = vpop.f32.mrf.mxu0
    %v234 = vadd.f32 %v165, %v233
    %v235 = vpop.f32.mrf.mxu0
    %236 = vdwg.mxu0
    %vm237 = vcmask 31744
    %238 = vst.msk [vmem:[%s5] sm:$0xff] %vm237, %v234
    // Predicated region
    $region34: #{tpu_custom_call.1} parent=1 // pred_check
      _
    $region35: #{tpu_custom_call.1} parent=1 // pred_check_branch
      %240 = sbr.rel (0) target = $region37
    $region36: #{tpu_custom_call.1} parent=1 // pred_region
      _
    $region37: #{tpu_custom_call.1} parent=1 // pred_fallthru
      _
    // Predicated region
    $region38: #{tpu_custom_call.1} parent=1 // pred_check
      _
    $region39: #{tpu_custom_call.1} parent=1 // pred_check_branch
      %242 = sbr.rel (0) target = $region41
    $region40: #{tpu_custom_call.1} parent=1 // pred_region
      _
    $region41: #{tpu_custom_call.1} parent=1 // pred_fallthru
      _
    %243 = vsyncpa [#allocation3], 1
    %244 = vsyncpa [#allocation5], 1

</llo_original>
